<compile_context>
chip_gen: v5e
topology: v5e:2x2
jax: 0.10.0
libtpu: 0.0.40
codegen_flags: <defaults>
</compile_context>

<pallas_src>
import math

import jax
import jax.numpy as jnp
from jax import lax
from jax.experimental import pallas as pl
from jax.experimental.pallas import tpu as pltpu


# ----------------------------------------------------------------------------
# Kernel: one (batch, head) grid step.
# ----------------------------------------------------------------------------
def _attn_kernel(x_ref, wqkv_ref, bqkv_ref, wp_ref, bp_ref,
                 cos_ref, sin_ref, rot_ref,
                 y_ref, attn_ref):
    h = pl.program_id(1)

    x = x_ref[0]                                   # (T, C) bf16
    T = x.shape[0]
    hd = cos_ref.shape[1]
    scale = 1.0 / math.sqrt(hd)

    # Fused per-head QKV projection: (T, C) @ (C, 3*hd), bf16 in, f32 accumulate.
    qkv = jnp.dot(x, wqkv_ref[0],
                  preferred_element_type=jnp.float32) + bqkv_ref[0]   # (T, 3*hd)
    q = qkv[:, :hd]
    k = qkv[:, hd:2 * hd]
    v = qkv[:, 2 * hd:]

    # Interleaved RoPE. alt[2i] = -t[2i+1], alt[2i+1] = t[2i]  ==  t @ rot
    # (signed pair-swap permutation matmul on the MXU -> no lane shuffles).
    cos = cos_ref[...]                             # (T, hd) f32
    sin = sin_ref[...]
    rot = rot_ref[...]                             # (hd, hd) f32
    q = q * cos + jnp.dot(q, rot, preferred_element_type=jnp.float32) * sin
    k = k * cos + jnp.dot(k, rot, preferred_element_type=jnp.float32) * sin

    # Scores (bf16 MXU operands, f32 accumulate), causal mask, f32 softmax.
    att = lax.dot_general(q.astype(jnp.bfloat16), k.astype(jnp.bfloat16),
                          (((1,), (1,)), ((), ())),
                          preferred_element_type=jnp.float32) * scale  # (T, T)
    row = lax.broadcasted_iota(jnp.int32, (T, T), 0)
    col = lax.broadcasted_iota(jnp.int32, (T, T), 1)
    att = jnp.where(col <= row, att, jnp.float32(-1e30))   # finite mask (NaN-safe)
    att = jnp.exp(att - jnp.max(att, axis=-1, keepdims=True))
    att = att * pl.reciprocal(jnp.sum(att, axis=-1, keepdims=True), approx=True)

    # Lane-dense, written exactly once per (b, h) grid step.
    attn_ref[0, 0] = att.astype(attn_ref.dtype)

    # Per-head context and its slice of the output projection (reduction over h).
    y_h = jnp.dot(att.astype(jnp.bfloat16), v.astype(jnp.bfloat16),
                  preferred_element_type=jnp.float32)                 # (T, hd)
    contrib = jnp.dot(y_h.astype(jnp.bfloat16), wp_ref[0],
                      preferred_element_type=jnp.float32)             # (T, C)

    @pl.when(h == 0)
    def _init():
        y_ref[0] = (bp_ref[...] + contrib).astype(y_ref.dtype)

    @pl.when(h > 0)
    def _accum():
        y_ref[0] = y_ref[0] + contrib.astype(y_ref.dtype)


# ----------------------------------------------------------------------------
# Wrapper: builds RoPE tables, head-sliced / fused weights, calls pallas_call.
# ----------------------------------------------------------------------------
def causal_self_attention(x, params, n_head):
    """x: (B, T, C) float32. Returns (y (B, T, C), attn (B, n_head, T, T))."""
    B, T, C = x.shape
    assert C % n_head == 0
    hd = C // n_head

    # RoPE tables (matches rotary_position_embedding, current_idx=None).
    position = jnp.arange(T, dtype=jnp.float32)[:, None]                 # (T, 1)
    div_term = jnp.exp(jnp.arange(0, hd, 2, dtype=jnp.float32)
                       * (-(math.log(10000.0) / hd)))                    # (hd/2,)
    pe = position * div_term                                             # (T, hd/2)
    cos_emb = jnp.repeat(jnp.cos(pe), 2, axis=-1)                        # (T, hd)
    sin_emb = jnp.repeat(jnp.sin(pe), 2, axis=-1)                        # (T, hd)

    # Signed pair-swap matrix: (t @ rot)[2i] = -t[2i+1], (t @ rot)[2i+1] = t[2i].
    ev = jnp.arange(0, hd, 2)
    rot = jnp.zeros((hd, hd), jnp.float32)
    rot = rot.at[ev + 1, ev].set(-1.0)
    rot = rot.at[ev, ev + 1].set(1.0)

    # Fused per-head QKV weights: (n_head, C, 3*hd), bf16 MXU operands.
    def head_cols(w):  # (C, C) -> (n_head, C, hd)
        return jnp.transpose(w.reshape(C, n_head, hd), (1, 0, 2))

    wqkv = jnp.concatenate(
        [head_cols(params["wq"]), head_cols(params["wk"]), head_cols(params["wv"])],
        axis=-1).astype(jnp.bfloat16)                                    # (n_head, C, 3*hd)
    bqkv = jnp.concatenate(
        [params["bq"].reshape(n_head, hd),
         params["bk"].reshape(n_head, hd),
         params["bv"].reshape(n_head, hd)],
        axis=-1).reshape(n_head, 1, 3 * hd)                              # f32
    wp = params["wp"].reshape(n_head, hd, C).astype(jnp.bfloat16)        # (n_head, hd, C)
    bp = params["bp"].reshape(1, C)                                      # f32

    x_bf = x.astype(jnp.bfloat16)

    y, attn = pl.pallas_call(
        _attn_kernel,
        out_shape=(
            jax.ShapeDtypeStruct((B, T, C), jnp.float32),
            jax.ShapeDtypeStruct((B, n_head, T, T), jnp.float32),
        ),
        grid_spec=pltpu.PrefetchScalarGridSpec(
            num_scalar_prefetch=0,
            grid=(B, n_head),                      # head (reduction for y) is last
            in_specs=[
                pl.BlockSpec((1, T, C), lambda b, h: (b, 0, 0)),        # x
                pl.BlockSpec((1, C, 3 * hd), lambda b, h: (h, 0, 0)),   # wqkv (per head)
                pl.BlockSpec((1, 1, 3 * hd), lambda b, h: (h, 0, 0)),   # bqkv (per head)
                pl.BlockSpec((1, hd, C), lambda b, h: (h, 0, 0)),       # wp rows (per head)
                pl.BlockSpec((1, C), lambda b, h: (0, 0)),              # bp
                pl.BlockSpec((T, hd), lambda b, h: (0, 0)),             # cos
                pl.BlockSpec((T, hd), lambda b, h: (0, 0)),             # sin
                pl.BlockSpec((hd, hd), lambda b, h: (0, 0)),            # rot
            ],
            out_specs=[
                pl.BlockSpec((1, T, C), lambda b, h: (b, 0, 0)),        # y (resident over h)
                pl.BlockSpec((1, 1, T, T), lambda b, h: (b, h, 0, 0)),  # attn per (b, h)
            ],
        ),
        compiler_params=pltpu.CompilerParams(
            dimension_semantics=("parallel", "arbitrary"),
            vmem_limit_bytes=64 * 1024 * 1024,
        ),
    )(x_bf, wqkv, bqkv, wp, bp, cos_emb, sin_emb, rot)

    return y, attn


# ----------------------------------------------------------------------------
# Pure-JAX f32 reference mirroring the PyTorch module (for verification).
# ----------------------------------------------------------------------------
def ref_forward(x, params, n_head):
    B, T, C = x.shape
    hd = C // n_head

    def lin(t, w, b):
        return t @ w + b

    q = lin(x, params["wq"], params["bq"]).reshape(B, T, n_head, hd).transpose(0, 2, 1, 3)
    k = lin(x, params["wk"], params["bk"]).reshape(B, T, n_head, hd).transpose(0, 2, 1, 3)
    v = lin(x, params["wv"], params["bv"]).reshape(B, T, n_head, hd).transpose(0, 2, 1, 3)

    position = jnp.arange(T, dtype=jnp.float32)[:, None]
    div_term = jnp.exp(jnp.arange(0, hd, 2, dtype=jnp.float32) * (-(math.log(10000.0) / hd)))
    pe = position * div_term
    cos_emb = jnp.repeat(jnp.cos(pe), 2, axis=-1)
    sin_emb = jnp.repeat(jnp.sin(pe), 2, axis=-1)

    def rope(t):
        alt = jnp.stack([-t[..., 1::2], t[..., ::2]], axis=-1).reshape(t.shape)
        return t * cos_emb + alt * sin_emb

    q, k = rope(q), rope(k)

    att = (q @ jnp.swapaxes(k, -2, -1)) * (1.0 / math.sqrt(hd))
    mask = jnp.tril(jnp.ones((T, T)))[None, None]
    att = jnp.where(mask == 0, -jnp.inf, att)
    att = jax.nn.softmax(att, axis=-1)
    y = att @ v
    y = y.transpose(0, 2, 1, 3).reshape(B, T, C)
    y = lin(y, params["wp"], params["bp"])
    return y, att


# ----------------------------------------------------------------------------
if __name__ == "__main__":
    B, T, C, n_head = 2, 8, 32, 4

    key = jax.random.PRNGKey(0)
    keys = jax.random.split(key, 9)
    init = lambda k, shape: (0.02 * jax.random.normal(k, shape)).astype(jnp.float32)

    params = {
        "wq": init(keys[0], (C, C)), "bq": init(keys[1], (C,)),
        "wk": init(keys[2], (C, C)), "bk": init(keys[3], (C,)),
        "wv": init(keys[4], (C, C)), "bv": init(keys[5], (C,)),
        "wp": init(keys[6], (C, C)), "bp": init(keys[7], (C,)),
    }
    x = jax.random.normal(keys[8], (B, T, C), dtype=jnp.float32)

    y, attn = causal_self_attention(x, params, n_head)
    jax.block_until_ready((y, attn))

    y_ref, attn_ref = ref_forward(x, params, n_head)
    # Tolerances loosened vs. f32 reference: bf16 MXU operands + approx reciprocal.
    assert jnp.allclose(y, y_ref, rtol=2e-2, atol=2e-2), "output mismatch"
    assert jnp.allclose(attn, attn_ref, rtol=2e-2, atol=2e-2), "attn mismatch"

    print("KERNEL_OK")
</pallas_src>

<mosaic_0001>
module attributes {stable_mosaic.version = 11 : i64} {
  func.func @_attn_kernel(%arg0: i32, %arg1: i32, %arg2: memref<1x8x32xbf16, #tpu.memory_space<vmem>>, %arg3: memref<1x32x24xbf16, #tpu.memory_space<vmem>>, %arg4: memref<1x1x24xf32, #tpu.memory_space<vmem>>, %arg5: memref<1x8x32xbf16, #tpu.memory_space<vmem>>, %arg6: memref<1x32xf32, #tpu.memory_space<vmem>>, %arg7: memref<8x8xf32, #tpu.memory_space<vmem>>, %arg8: memref<8x8xf32, #tpu.memory_space<vmem>>, %arg9: memref<8x8xf32, #tpu.memory_space<vmem>>, %arg10: memref<1x8x32xf32, #tpu.memory_space<vmem>>, %arg11: memref<1x1x8x8xf32, #tpu.memory_space<vmem>>) attributes {dimension_semantics = [#tpu.dimension_semantics<parallel>, #tpu.dimension_semantics<arbitrary>], iteration_bounds = array<i64: 2, 4>, scalar_prefetch = 0 : i64, scratch_operands = 0 : i64, tpu.core_type = #tpu.core_type<tc>, window_params = [{transform_indices = @transform_0, window_bounds = array<i64: 1, 8, 32>}, {transform_indices = @transform_1, window_bounds = array<i64: 1, 32, 24>}, {transform_indices = @transform_2, window_bounds = array<i64: 1, 1, 24>}, {transform_indices = @transform_3, window_bounds = array<i64: 1, 8, 32>}, {pipeline_mode = #tpu.pipeline_mode<synchronous>, transform_indices = @transform_4, window_bounds = array<i64: 1, 32>}, {pipeline_mode = #tpu.pipeline_mode<synchronous>, transform_indices = @transform_5, window_bounds = array<i64: 8, 8>}, {pipeline_mode = #tpu.pipeline_mode<synchronous>, transform_indices = @transform_6, window_bounds = array<i64: 8, 8>}, {pipeline_mode = #tpu.pipeline_mode<synchronous>, transform_indices = @transform_7, window_bounds = array<i64: 8, 8>}, {transform_indices = @transform_8, window_bounds = array<i64: 1, 8, 32>}, {transform_indices = @transform_9, window_bounds = array<i64: 1, 1, 8, 8>}]} {
    %c0 = arith.constant 0 : index
    %c0_0 = arith.constant 0 : index
    %c0_1 = arith.constant 0 : index
    %0 = vector.load %arg2[%c0, %c0_0, %c0_1] : memref<1x8x32xbf16, #tpu.memory_space<vmem>>, vector<1x8x32xbf16>
    %1 = vector.shape_cast %0 : vector<1x8x32xbf16> to vector<8x32xbf16>
    %c0_2 = arith.constant 0 : index
    %c0_3 = arith.constant 0 : index
    %c0_4 = arith.constant 0 : index
    %2 = vector.load %arg3[%c0_2, %c0_3, %c0_4] : memref<1x32x24xbf16, #tpu.memory_space<vmem>>, vector<1x32x24xbf16>
    %3 = vector.shape_cast %2 : vector<1x32x24xbf16> to vector<32x24xbf16>
    %cst = arith.constant dense<0.000000e+00> : vector<8x24xf32>
    %4 = tpu.matmul %1, %3, %cst {dimension_numbers = #tpu.dot_dimension_numbers<[1], [0], [0], [1], [0, 0, 1, 1], [], []>} : vector<8x32xbf16>, vector<32x24xbf16>, vector<8x24xf32> -> vector<8x24xf32>
    %c0_5 = arith.constant 0 : index
    %c0_6 = arith.constant 0 : index
    %c0_7 = arith.constant 0 : index
    %5 = vector.load %arg4[%c0_5, %c0_6, %c0_7] : memref<1x1x24xf32, #tpu.memory_space<vmem>>, vector<1x1x24xf32>
    %6 = vector.shape_cast %5 : vector<1x1x24xf32> to vector<1x24xf32>
    %7 = vector.broadcast %6 : vector<1x24xf32> to vector<8x24xf32>
    %8 = arith.addf %4, %7 : vector<8x24xf32>
    %9 = vector.extract_strided_slice %8 {offsets = [0, 0], sizes = [8, 8], strides = [1, 1]} : vector<8x24xf32> to vector<8x8xf32>
    %10 = vector.extract_strided_slice %8 {offsets = [0, 8], sizes = [8, 8], strides = [1, 1]} : vector<8x24xf32> to vector<8x8xf32>
    %11 = vector.extract_strided_slice %8 {offsets = [0, 16], sizes = [8, 8], strides = [1, 1]} : vector<8x24xf32> to vector<8x8xf32>
    %c0_8 = arith.constant 0 : index
    %c0_9 = arith.constant 0 : index
    %12 = vector.load %arg7[%c0_8, %c0_9] : memref<8x8xf32, #tpu.memory_space<vmem>>, vector<8x8xf32>
    %c0_10 = arith.constant 0 : index
    %c0_11 = arith.constant 0 : index
    %13 = vector.load %arg8[%c0_10, %c0_11] : memref<8x8xf32, #tpu.memory_space<vmem>>, vector<8x8xf32>
    %c0_12 = arith.constant 0 : index
    %c0_13 = arith.constant 0 : index
    %14 = vector.load %arg9[%c0_12, %c0_13] : memref<8x8xf32, #tpu.memory_space<vmem>>, vector<8x8xf32>
    %15 = arith.mulf %9, %12 : vector<8x8xf32>
    %cst_14 = arith.constant dense<0.000000e+00> : vector<8x8xf32>
    %16 = tpu.matmul %9, %14, %cst_14 {dimension_numbers = #tpu.dot_dimension_numbers<[1], [0], [0], [1], [0, 0, 1, 1], [], []>} : vector<8x8xf32>, vector<8x8xf32>, vector<8x8xf32> -> vector<8x8xf32>
    %17 = arith.mulf %16, %13 : vector<8x8xf32>
    %18 = arith.addf %15, %17 : vector<8x8xf32>
    %19 = arith.mulf %10, %12 : vector<8x8xf32>
    %cst_15 = arith.constant dense<0.000000e+00> : vector<8x8xf32>
    %20 = tpu.matmul %10, %14, %cst_15 {dimension_numbers = #tpu.dot_dimension_numbers<[1], [0], [0], [1], [0, 0, 1, 1], [], []>} : vector<8x8xf32>, vector<8x8xf32>, vector<8x8xf32> -> vector<8x8xf32>
    %21 = arith.mulf %20, %13 : vector<8x8xf32>
    %22 = arith.addf %19, %21 : vector<8x8xf32>
    %23 = arith.truncf %18 : vector<8x8xf32> to vector<8x8xbf16>
    %24 = arith.truncf %22 : vector<8x8xf32> to vector<8x8xbf16>
    %cst_16 = arith.constant dense<0.000000e+00> : vector<8x8xf32>
    %25 = tpu.matmul %23, %24, %cst_16 {dimension_numbers = #tpu.dot_dimension_numbers<[1], [1], [0], [0], [0, 0, 1, 0], [], []>} : vector<8x8xbf16>, vector<8x8xbf16>, vector<8x8xf32> -> vector<8x8xf32>
    %cst_17 = arith.constant 0.353553385 : f32
    %26 = vector.broadcast %cst_17 : f32 to vector<8x8xf32>
    %27 = arith.mulf %25, %26 : vector<8x8xf32>
    %28 = tpu.iota {dimensions = array<i32: 0>} : vector<8x8xi32>
    %29 = tpu.iota {dimensions = array<i32: 1>} : vector<8x8xi32>
    %30 = arith.cmpi sle, %29, %28 : vector<8x8xi32>
    %cst_18 = arith.constant -1.000000e+30 : f32
    %31 = vector.broadcast %cst_18 : f32 to vector<8x8xf32>
    %32 = arith.select %30, %27, %31 : vector<8x8xi1>, vector<8x8xf32>
    %cst_19 = arith.constant dense<0xFF800000> : vector<8xf32>
    %33 = vector.multi_reduction <maximumf>, %32, %cst_19 [1] : vector<8x8xf32> to vector<8xf32>
    %34 = vector.shape_cast %33 : vector<8xf32> to vector<8x1xf32>
    %35 = vector.broadcast %34 : vector<8x1xf32> to vector<8x8xf32>
    %36 = arith.subf %32, %35 : vector<8x8xf32>
    %37 = math.exp %36 : vector<8x8xf32>
    %cst_20 = arith.constant dense<0.000000e+00> : vector<8xf32>
    %38 = vector.multi_reduction <add>, %37, %cst_20 [1] : vector<8x8xf32> to vector<8xf32>
    %39 = vector.shape_cast %38 : vector<8xf32> to vector<8x1xf32>
    %40 = tpu.reciprocal %39 {approx = true} : vector<8x1xf32> -> vector<8x1xf32>
    %41 = vector.broadcast %40 : vector<8x1xf32> to vector<8x8xf32>
    %42 = arith.mulf %37, %41 : vector<8x8xf32>
    %c0_21 = arith.constant 0 : index
    %c0_22 = arith.constant 0 : index
    %c0_23 = arith.constant 0 : index
    %c0_24 = arith.constant 0 : index
    %43 = vector.load %arg11[%c0_21, %c0_22, %c0_23, %c0_24] : memref<1x1x8x8xf32, #tpu.memory_space<vmem>>, vector<1x1x8x8xf32>
    %44 = vector.shape_cast %43 : vector<1x1x8x8xf32> to vector<8x8xf32>
    %45 = vector.shape_cast %42 : vector<8x8xf32> to vector<1x1x8x8xf32>
    tpu.vector_store %arg11[%c0_21, %c0_22, %c0_23, %c0_24], %45 {strides = array<i32>} : memref<1x1x8x8xf32, #tpu.memory_space<vmem>>, vector<1x1x8x8xf32>,
    %46 = arith.truncf %42 : vector<8x8xf32> to vector<8x8xbf16>
    %47 = arith.truncf %11 : vector<8x8xf32> to vector<8x8xbf16>
    %cst_25 = arith.constant dense<0.000000e+00> : vector<8x8xf32>
    %48 = tpu.matmul %46, %47, %cst_25 {dimension_numbers = #tpu.dot_dimension_numbers<[1], [0], [0], [1], [0, 0, 1, 1], [], []>} : vector<8x8xbf16>, vector<8x8xbf16>, vector<8x8xf32> -> vector<8x8xf32>
    %49 = arith.truncf %48 : vector<8x8xf32> to vector<8x8xbf16>
    %c0_26 = arith.constant 0 : index
    %c0_27 = arith.constant 0 : index
    %c0_28 = arith.constant 0 : index
    %50 = vector.load %arg5[%c0_26, %c0_27, %c0_28] : memref<1x8x32xbf16, #tpu.memory_space<vmem>>, vector<1x8x32xbf16>
    %51 = vector.shape_cast %50 : vector<1x8x32xbf16> to vector<8x32xbf16>
    %cst_29 = arith.constant dense<0.000000e+00> : vector<8x32xf32>
    %52 = tpu.matmul %49, %51, %cst_29 {dimension_numbers = #tpu.dot_dimension_numbers<[1], [0], [0], [1], [0, 0, 1, 1], [], []>} : vector<8x8xbf16>, vector<8x32xbf16>, vector<8x32xf32> -> vector<8x32xf32>
    %c0_i32 = arith.constant 0 : i32
    %53 = arith.cmpi eq, %arg1, %c0_i32 : i32
    %54 = arith.extui %53 : i1 to i32
    %c0_i32_30 = arith.constant 0 : i32
    %55 = arith.cmpi ne, %54, %c0_i32_30 : i32
    scf.if %55 {
      %c0_33 = arith.constant 0 : index
      %c0_34 = arith.constant 0 : index
      %59 = vector.load %arg6[%c0_33, %c0_34] : memref<1x32xf32, #tpu.memory_space<vmem>>, vector<1x32xf32>
      %60 = vector.broadcast %59 : vector<1x32xf32> to vector<8x32xf32>
      %61 = arith.addf %60, %52 : vector<8x32xf32>
      %c0_35 = arith.constant 0 : index
      %c0_36 = arith.constant 0 : index
      %c0_37 = arith.constant 0 : index
      %62 = vector.load %arg10[%c0_35, %c0_36, %c0_37] : memref<1x8x32xf32, #tpu.memory_space<vmem>>, vector<1x8x32xf32>
      %63 = vector.shape_cast %62 : vector<1x8x32xf32> to vector<8x32xf32>
      %64 = vector.shape_cast %61 : vector<8x32xf32> to vector<1x8x32xf32>
      tpu.vector_store %arg10[%c0_35, %c0_36, %c0_37], %64 {strides = array<i32>} : memref<1x8x32xf32, #tpu.memory_space<vmem>>, vector<1x8x32xf32>,
    } else {
    }
    %c0_i32_31 = arith.constant 0 : i32
    %56 = arith.cmpi sgt, %arg1, %c0_i32_31 : i32
    %57 = arith.extui %56 : i1 to i32
    %c0_i32_32 = arith.constant 0 : i32
    %58 = arith.cmpi ne, %57, %c0_i32_32 : i32
    scf.if %58 {
      %c0_33 = arith.constant 0 : index
      %c0_34 = arith.constant 0 : index
      %c0_35 = arith.constant 0 : index
      %59 = vector.load %arg10[%c0_33, %c0_34, %c0_35] : memref<1x8x32xf32, #tpu.memory_space<vmem>>, vector<1x8x32xf32>
      %60 = vector.shape_cast %59 : vector<1x8x32xf32> to vector<8x32xf32>
      %61 = arith.addf %60, %52 : vector<8x32xf32>
      %c0_36 = arith.constant 0 : index
      %c0_37 = arith.constant 0 : index
      %c0_38 = arith.constant 0 : index
      %62 = vector.load %arg10[%c0_36, %c0_37, %c0_38] : memref<1x8x32xf32, #tpu.memory_space<vmem>>, vector<1x8x32xf32>
      %63 = vector.shape_cast %62 : vector<1x8x32xf32> to vector<8x32xf32>
      %64 = vector.shape_cast %61 : vector<8x32xf32> to vector<1x8x32xf32>
      tpu.vector_store %arg10[%c0_36, %c0_37, %c0_38], %64 {strides = array<i32>} : memref<1x8x32xf32, #tpu.memory_space<vmem>>, vector<1x8x32xf32>,
    } else {
    }
    return
  }
  func.func @transform_0(%arg0: i32, %arg1: i32) -> (i32, i32, i32) {
    %c0_i32 = arith.constant 0 : i32
    %c0_i32_0 = arith.constant 0 : i32
    %c0_i32_1 = arith.constant 0 : i32
    return %arg0, %c0_i32, %c0_i32_0 : i32, i32, i32
  }
  func.func @transform_1(%arg0: i32, %arg1: i32) -> (i32, i32, i32) {
    %c0_i32 = arith.constant 0 : i32
    %c0_i32_0 = arith.constant 0 : i32
    %c0_i32_1 = arith.constant 0 : i32
    return %arg1, %c0_i32, %c0_i32_0 : i32, i32, i32
  }
  func.func @transform_2(%arg0: i32, %arg1: i32) -> (i32, i32, i32) {
    %c0_i32 = arith.constant 0 : i32
    %c0_i32_0 = arith.constant 0 : i32
    %c0_i32_1 = arith.constant 0 : i32
    return %arg1, %c0_i32, %c0_i32_0 : i32, i32, i32
  }
  func.func @transform_3(%arg0: i32, %arg1: i32) -> (i32, i32, i32) {
    %c0_i32 = arith.constant 0 : i32
    %c0_i32_0 = arith.constant 0 : i32
    %c0_i32_1 = arith.constant 0 : i32
    return %arg1, %c0_i32, %c0_i32_0 : i32, i32, i32
  }
  func.func @transform_4(%arg0: i32, %arg1: i32) -> (i32, i32) {
    %c0_i32 = arith.constant 0 : i32
    %c0_i32_0 = arith.constant 0 : i32
    %c0_i32_1 = arith.constant 0 : i32
    return %c0_i32, %c0_i32_0 : i32, i32
  }
  func.func @transform_5(%arg0: i32, %arg1: i32) -> (i32, i32) {
    %c0_i32 = arith.constant 0 : i32
    %c0_i32_0 = arith.constant 0 : i32
    %c0_i32_1 = arith.constant 0 : i32
    return %c0_i32, %c0_i32_0 : i32, i32
  }
  func.func @transform_6(%arg0: i32, %arg1: i32) -> (i32, i32) {
    %c0_i32 = arith.constant 0 : i32
    %c0_i32_0 = arith.constant 0 : i32
    %c0_i32_1 = arith.constant 0 : i32
    return %c0_i32, %c0_i32_0 : i32, i32
  }
  func.func @transform_7(%arg0: i32, %arg1: i32) -> (i32, i32) {
    %c0_i32 = arith.constant 0 : i32
    %c0_i32_0 = arith.constant 0 : i32
    %c0_i32_1 = arith.constant 0 : i32
    return %c0_i32, %c0_i32_0 : i32, i32
  }
  func.func @transform_8(%arg0: i32, %arg1: i32) -> (i32, i32, i32) {
    %c0_i32 = arith.constant 0 : i32
    %c0_i32_0 = arith.constant 0 : i32
    %c0_i32_1 = arith.constant 0 : i32
    return %arg0, %c0_i32, %c0_i32_0 : i32, i32, i32
  }
  func.func @transform_9(%arg0: i32, %arg1: i32) -> (i32, i32, i32, i32) {
    %c0_i32 = arith.constant 0 : i32
    %c0_i32_0 = arith.constant 0 : i32
    %c0_i32_1 = arith.constant 0 : i32
    return %arg0, %arg1, %c0_i32, %c0_i32_0 : i32, i32, i32, i32
  }
}

</mosaic_0001>

<llo_original>
// kernel: tpu_custom_call.1
$region0: #{tpu_custom_call.1}
  #allocation0 [shape = 'u32[]', space=smem, size = 0x4, offset = 0x4, fixed_abs, tag = 'smem constant byte address 0x4 - core index']
  #allocation1 [shape = 'u32[72,128]{1,0:T(1,128)}', space=vmem, size = 0x9000, scoped, tag = 'internal scratch']
  %s0 = inlined_call_operand.vmem [shape: bf16[2,8,32], index: 0, kind: input, shape index: {}]
  %s1 = inlined_call_operand.vmem [shape: bf16[4,32,24], index: 1, kind: input, shape index: {}]
  %s2 = inlined_call_operand.vmem [shape: f32[4,1,24], index: 2, kind: input, shape index: {}]
  %s3 = inlined_call_operand.vmem [shape: bf16[4,8,32], index: 3, kind: input, shape index: {}]
  %s4 = inlined_call_operand.vmem [shape: f32[1,32], index: 4, kind: input, shape index: {}]
  %s5 = inlined_call_operand.vmem [shape: f32[8,8], index: 5, kind: input, shape index: {}]
  %s6 = inlined_call_operand.vmem [shape: f32[8,8], index: 6, kind: input, shape index: {}]
  %s7 = inlined_call_operand.vmem [shape: f32[8,8], index: 7, kind: input, shape index: {}]
  %s8 = inlined_call_operand.hbm [shape: f32[2,8,32], index: 8, kind: output, shape index: {0}]
  %s9 = inlined_call_operand.hbm [shape: f32[2,4,8,8], index: 9, kind: output, shape index: {1}]
  %10 = xla_tuple %s8, %s9
  %s11 = sld [smem:[#allocation0]]
  $region81: #{tpu_custom_call.1} parent=0
    _
  %s13 = ssub.s32 1, %s11
  %s14 = scalar_select 0, %s13, %s11
  $region1: #{tpu_custom_call.1} parent=0
    #allocation2 [shape = 'u8[8192]{0}', space=vmem, size = 0x2000, scoped, tag = 'output window, operand 0']
    #allocation3 [shape = 's32[2]{0}', space=sflag, size = 0x8, scoped, tag = 'scoped memory for tpu_custom_call.1']
    #allocation4 [shape = 'u8[8192]{0}', space=vmem, size = 0x2000, scoped, tag = 'output window, operand 1']
    #allocation5 [shape = 's32[2]{0}', space=sflag, size = 0x8, scoped, tag = 'scoped memory for tpu_custom_call.1']
    %15 = vsyncpa [#allocation3], 0
    %s16 = scalar_lea.sflag [#allocation3], 1
    %17 = vsyncpa %s16, 0
    %18 = vsyncpa [#allocation5], 0
    %s19 = scalar_lea.sflag [#allocation5], 1
    %20 = vsyncpa %s19, 0
    loop: start=0, step=1, limit=10
    $region2: #{tpu_custom_call.1} parent=1 // loop_pre_header
      _
    $region3: #{tpu_custom_call.1} parent=1 // loop_header
      %s22 = sphi 0, %s26
      %p23 = scmp.ge.s32.totalorder %s22, 10
      %s29 = sphi 0, %s41
      %s30 = sphi 0, %s37
      %s31 = sphi 0, %s29
      %s32 = sphi 0, %s30
      %s33 = sphi 0, %s31
      %s34 = sphi 0, %s32
      %s44 = sphi 0, %s46
      %s47 = sphi 0, %s44
      %s48 = sphi 0, %s47
      %s64 = sphi 0, %s48
      %s70 = sphi 0, %s72
      %s73 = sphi 0, %s70
      %s74 = sphi 0, %s73
      %s90 = sphi 0, %s74
      %s96 = sphi 0, %s98
      %s99 = sphi 0, %s96
      %s100 = sphi 0, %s99
      %s116 = sphi 0, %s100
      %s122 = sphi 0, %s124
      %s125 = sphi 0, %s122
      %s126 = sphi 0, %s125
      %s142 = sphi 0, %s126
      %s146 = sphi 0, %s146
      %s148 = sphi 0, %s146
      %s149 = sphi 0, %s148
      %s163 = sphi 0, %s149
      %s167 = sphi 0, %s167
      %s169 = sphi 0, %s167
      %s170 = sphi 0, %s169
      %s184 = sphi 0, %s170
      %s188 = sphi 0, %s188
      %s190 = sphi 0, %s188
      %s191 = sphi 0, %s190
      %s205 = sphi 0, %s191
      %s209 = sphi 0, %s209
      %s211 = sphi 0, %s209
      %s212 = sphi 0, %s211
      %s226 = sphi 0, %s212
      %s232 = sphi 0, %s234
      %s235 = sphi 0, %s232
      %s236 = sphi 0, %s235
      %s252 = sphi 0, %s236
      %s260 = sphi 0, %s262
      %s263 = sphi 0, %s260
      %s264 = sphi 0, %s263
      %s280 = sphi 0, %s264
    $region4: #{tpu_custom_call.1} parent=1 // loop_header_branch
      %25 = sbr.rel (%p23) target = $region8
    $region5: #{tpu_custom_call.1} parent=1 // loop_body
      %s27 = ssub.s32 %s22, 1
      %s28 = ssub.s32 %s22, 2
      %s35 = sadd.s32 1, %s30
      %p36 = scmp.ge.s32.totalorder %s35, 4
      %s37 = scalar_select %p36, 0, %s35
      %s38 = sadd.s32 1, %s29
      %s39 = scalar_select %p36, %s38, %s29
      %p40 = scmp.ge.s32.totalorder %s39, 2
      %s41 = scalar_select %p40, 0, %s39
      %s42 = ssub.s32 %s29, %s41
      %p43 = scmp.eq.s32.totalorder %s42, 0
      %s45 = sadd.s32 %s44, 1
      %s46 = scalar_select %p43, %s44, %s45
      %p49 = pneg %p43
      %p50 = scmp.eq.s32.totalorder %s22, 7
      %p51 = por %p49, %p50
      %p52 = scmp.ne.s32.totalorder %s44, %s47
      %p53 = scmp.eq.s32.totalorder %s22, 0
      %p54 = por %p52, %p53
      %p55 = scmp.ne.s32.totalorder %s44, %s47
      %p56 = scmp.eq.s32.totalorder %s27, 7
      %p57 = por %p55, %p56
      %p58 = scmp.ne.s32.totalorder %s47, %s48
      %p59 = scmp.eq.s32.totalorder %s27, 0
      %p60 = por %p58, %p59
      %p61 = scmp.ne.s32.totalorder %s47, %s48
      %p62 = scmp.eq.s32.totalorder %s28, 7
      %p63 = por %p61, %p62
      %p65 = scmp.ne.s32.totalorder %s48, %s64
      %p66 = scmp.eq.s32.totalorder %s28, 0
      %p67 = por %p65, %p66
      %s68 = ssub.s32 %s30, %s37
      %p69 = scmp.eq.s32.totalorder %s68, 0
      %s71 = sadd.s32 %s70, 1
      %s72 = scalar_select %p69, %s70, %s71
      %p75 = pneg %p69
      %p76 = scmp.eq.s32.totalorder %s22, 7
      %p77 = por %p75, %p76
      %p78 = scmp.ne.s32.totalorder %s70, %s73
      %p79 = scmp.eq.s32.totalorder %s22, 0
      %p80 = por %p78, %p79
      %p81 = scmp.ne.s32.totalorder %s70, %s73
      %p82 = scmp.eq.s32.totalorder %s27, 7
      %p83 = por %p81, %p82
      %p84 = scmp.ne.s32.totalorder %s73, %s74
      %p85 = scmp.eq.s32.totalorder %s27, 0
      %p86 = por %p84, %p85
      %p87 = scmp.ne.s32.totalorder %s73, %s74
      %p88 = scmp.eq.s32.totalorder %s28, 7
      %p89 = por %p87, %p88
      %p91 = scmp.ne.s32.totalorder %s74, %s90
      %p92 = scmp.eq.s32.totalorder %s28, 0
      %p93 = por %p91, %p92
      %s94 = ssub.s32 %s30, %s37
      %p95 = scmp.eq.s32.totalorder %s94, 0
      %s97 = sadd.s32 %s96, 1
      %s98 = scalar_select %p95, %s96, %s97
      %p101 = pneg %p95
      %p102 = scmp.eq.s32.totalorder %s22, 7
      %p103 = por %p101, %p102
      %p104 = scmp.ne.s32.totalorder %s96, %s99
      %p105 = scmp.eq.s32.totalorder %s22, 0
      %p106 = por %p104, %p105
      %p107 = scmp.ne.s32.totalorder %s96, %s99
      %p108 = scmp.eq.s32.totalorder %s27, 7
      %p109 = por %p107, %p108
      %p110 = scmp.ne.s32.totalorder %s99, %s100
      %p111 = scmp.eq.s32.totalorder %s27, 0
      %p112 = por %p110, %p111
      %p113 = scmp.ne.s32.totalorder %s99, %s100
      %p114 = scmp.eq.s32.totalorder %s28, 7
      %p115 = por %p113, %p114
      %p117 = scmp.ne.s32.totalorder %s100, %s116
      %p118 = scmp.eq.s32.totalorder %s28, 0
      %p119 = por %p117, %p118
      %s120 = ssub.s32 %s30, %s37
      %p121 = scmp.eq.s32.totalorder %s120, 0
      %s123 = sadd.s32 %s122, 1
      %s124 = scalar_select %p121, %s122, %s123
      %p127 = pneg %p121
      %p128 = scmp.eq.s32.totalorder %s22, 7
      %p129 = por %p127, %p128
      %p130 = scmp.ne.s32.totalorder %s122, %s125
      %p131 = scmp.eq.s32.totalorder %s22, 0
      %p132 = por %p130, %p131
      %p133 = scmp.ne.s32.totalorder %s122, %s125
      %p134 = scmp.eq.s32.totalorder %s27, 7
      %p135 = por %p133, %p134
      %p136 = scmp.ne.s32.totalorder %s125, %s126
      %p137 = scmp.eq.s32.totalorder %s27, 0
      %p138 = por %p136, %p137
      %p139 = scmp.ne.s32.totalorder %s125, %s126
      %p140 = scmp.eq.s32.totalorder %s28, 7
      %p141 = por %p139, %p140
      %p143 = scmp.ne.s32.totalorder %s126, %s142
      %p144 = scmp.eq.s32.totalorder %s28, 0
      %p145 = por %p143, %p144
      %s147 = sadd.s32 %s146, 1
      %p150 = scmp.eq.s32.totalorder %s22, 7
      %p151 = scmp.ne.s32.totalorder %s146, %s148
      %p152 = scmp.eq.s32.totalorder %s22, 0
      %p153 = por %p151, %p152
      %p154 = scmp.ne.s32.totalorder %s146, %s148
      %p155 = scmp.eq.s32.totalorder %s27, 7
      %p156 = por %p154, %p155
      %p157 = scmp.ne.s32.totalorder %s148, %s149
      %p158 = scmp.eq.s32.totalorder %s27, 0
      %p159 = por %p157, %p158
      %p160 = scmp.ne.s32.totalorder %s148, %s149
      %p161 = scmp.eq.s32.totalorder %s28, 7
      %p162 = por %p160, %p161
      %p164 = scmp.ne.s32.totalorder %s149, %s163
      %p165 = scmp.eq.s32.totalorder %s28, 0
      %p166 = por %p164, %p165
      %s168 = sadd.s32 %s167, 1
      %p171 = scmp.eq.s32.totalorder %s22, 7
      %p172 = scmp.ne.s32.totalorder %s167, %s169
      %p173 = scmp.eq.s32.totalorder %s22, 0
      %p174 = por %p172, %p173
      %p175 = scmp.ne.s32.totalorder %s167, %s169
      %p176 = scmp.eq.s32.totalorder %s27, 7
      %p177 = por %p175, %p176
      %p178 = scmp.ne.s32.totalorder %s169, %s170
      %p179 = scmp.eq.s32.totalorder %s27, 0
      %p180 = por %p178, %p179
      %p181 = scmp.ne.s32.totalorder %s169, %s170
      %p182 = scmp.eq.s32.totalorder %s28, 7
      %p183 = por %p181, %p182
      %p185 = scmp.ne.s32.totalorder %s170, %s184
      %p186 = scmp.eq.s32.totalorder %s28, 0
      %p187 = por %p185, %p186
      %s189 = sadd.s32 %s188, 1
      %p192 = scmp.eq.s32.totalorder %s22, 7
      %p193 = scmp.ne.s32.totalorder %s188, %s190
      %p194 = scmp.eq.s32.totalorder %s22, 0
      %p195 = por %p193, %p194
      %p196 = scmp.ne.s32.totalorder %s188, %s190
      %p197 = scmp.eq.s32.totalorder %s27, 7
      %p198 = por %p196, %p197
      %p199 = scmp.ne.s32.totalorder %s190, %s191
      %p200 = scmp.eq.s32.totalorder %s27, 0
      %p201 = por %p199, %p200
      %p202 = scmp.ne.s32.totalorder %s190, %s191
      %p203 = scmp.eq.s32.totalorder %s28, 7
      %p204 = por %p202, %p203
      %p206 = scmp.ne.s32.totalorder %s191, %s205
      %p207 = scmp.eq.s32.totalorder %s28, 0
      %p208 = por %p206, %p207
      %s210 = sadd.s32 %s209, 1
      %p213 = scmp.eq.s32.totalorder %s22, 7
      %p214 = scmp.ne.s32.totalorder %s209, %s211
      %p215 = scmp.eq.s32.totalorder %s22, 0
      %p216 = por %p214, %p215
      %p217 = scmp.ne.s32.totalorder %s209, %s211
      %p218 = scmp.eq.s32.totalorder %s27, 7
      %p219 = por %p217, %p218
      %p220 = scmp.ne.s32.totalorder %s211, %s212
      %p221 = scmp.eq.s32.totalorder %s27, 0
      %p222 = por %p220, %p221
      %p223 = scmp.ne.s32.totalorder %s211, %s212
      %p224 = scmp.eq.s32.totalorder %s28, 7
      %p225 = por %p223, %p224
      %p227 = scmp.ne.s32.totalorder %s212, %s226
      %p228 = scmp.eq.s32.totalorder %s28, 0
      %p229 = por %p227, %p228
      %s230 = ssub.s32 %s29, %s41
      %p231 = scmp.eq.s32.totalorder %s230, 0
      %s233 = sadd.s32 %s232, 1
      %s234 = scalar_select %p231, %s232, %s233
      %p237 = pneg %p231
      %p238 = scmp.eq.s32.totalorder %s22, 7
      %p239 = por %p237, %p238
      %p240 = scmp.ne.s32.totalorder %s232, %s235
      %p241 = scmp.eq.s32.totalorder %s22, 0
      %p242 = por %p240, %p241
      %p243 = scmp.ne.s32.totalorder %s232, %s235
      %p244 = scmp.eq.s32.totalorder %s27, 7
      %p245 = por %p243, %p244
      %p246 = scmp.ne.s32.totalorder %s235, %s236
      %p247 = scmp.eq.s32.totalorder %s27, 0
      %p248 = por %p246, %p247
      %p249 = scmp.ne.s32.totalorder %s235, %s236
      %p250 = scmp.eq.s32.totalorder %s28, 7
      %p251 = por %p249, %p250
      %p253 = scmp.ne.s32.totalorder %s236, %s252
      %p254 = scmp.eq.s32.totalorder %s28, 0
      %p255 = por %p253, %p254
      %s256 = ssub.s32 %s29, %s41
      %s257 = ssub.s32 %s30, %s37
      %s258 = sor.u32 %s256, %s257
      %p259 = scmp.eq.s32.totalorder %s258, 0
      %s261 = sadd.s32 %s260, 1
      %s262 = scalar_select %p259, %s260, %s261
      %p265 = pneg %p259
      %p266 = scmp.eq.s32.totalorder %s22, 7
      %p267 = por %p265, %p266
      %p268 = scmp.ne.s32.totalorder %s260, %s263
      %p269 = scmp.eq.s32.totalorder %s22, 0
      %p270 = por %p268, %p269
      %p271 = scmp.ne.s32.totalorder %s260, %s263
      %p272 = scmp.eq.s32.totalorder %s27, 7
      %p273 = por %p271, %p272
      %p274 = scmp.ne.s32.totalorder %s263, %s264
      %p275 = scmp.eq.s32.totalorder %s27, 0
      %p276 = por %p274, %p275
      %p277 = scmp.ne.s32.totalorder %s263, %s264
      %p278 = scmp.eq.s32.totalorder %s28, 7
      %p279 = por %p277, %p278
      %p281 = scmp.ne.s32.totalorder %s264, %s280
      %p282 = scmp.eq.s32.totalorder %s28, 0
      %p283 = por %p281, %p282
      %p284 = scmp.le.s32.totalorder 1, %s22
      %p285 = scmp.lt.s32.totalorder %s22, 9
      %p286 = pnand %p284, %p285
      %p287 = pneg %p286
      // Predicated region
      $region9: #{tpu_custom_call.1} parent=5 // pred_check
        _
      $region10: #{tpu_custom_call.1} parent=5 // pred_check_branch
        %289 = sbr.rel (%p286) target = $region12
      $region11: #{tpu_custom_call.1} parent=5 // pred_region
        %s290 = ssub.s32 %s22, 1
        // Predicated region
        $region13: #{tpu_custom_call.1} parent=11 // pred_check
          %p291 = pneg %p159
        $region14: #{tpu_custom_call.1} parent=11 // pred_check_branch
          %293 = sbr.rel (%p291) target = $region16
        $region15: #{tpu_custom_call.1} parent=11 // pred_region
          _
        $region16: #{tpu_custom_call.1} parent=11 // pred_fallthru
          _
        // Predicated region
        $region17: #{tpu_custom_call.1} parent=11 // pred_check
          %p294 = pneg %p180
        $region18: #{tpu_custom_call.1} parent=11 // pred_check_branch
          %296 = sbr.rel (%p294) target = $region20
        $region19: #{tpu_custom_call.1} parent=11 // pred_region
          _
        $region20: #{tpu_custom_call.1} parent=11 // pred_fallthru
          _
        // Predicated region
        $region21: #{tpu_custom_call.1} parent=11 // pred_check
          %p297 = pneg %p201
        $region22: #{tpu_custom_call.1} parent=11 // pred_check_branch
          %299 = sbr.rel (%p297) target = $region24
        $region23: #{tpu_custom_call.1} parent=11 // pred_region
          _
        $region24: #{tpu_custom_call.1} parent=11 // pred_fallthru
          _
        // Predicated region
        $region25: #{tpu_custom_call.1} parent=11 // pred_check
          %p300 = pneg %p222
        $region26: #{tpu_custom_call.1} parent=11 // pred_check_branch
          %302 = sbr.rel (%p300) target = $region28
        $region27: #{tpu_custom_call.1} parent=11 // pred_region
          _
        $region28: #{tpu_custom_call.1} parent=11 // pred_fallthru
          _
      $region12: #{tpu_custom_call.1} parent=5 // pred_fallthru
        _
      %p303 = scmp.lt.s32.totalorder %s22, 8
      // Predicated region
      $region29: #{tpu_custom_call.1} parent=5 // pred_check
        %p304 = pneg %p303
      $region30: #{tpu_custom_call.1} parent=5 // pred_check_branch
        %306 = sbr.rel (%p304) target = $region32
      $region31: #{tpu_custom_call.1} parent=5 // pred_region
        // Predicated region
        $region33: #{tpu_custom_call.1} parent=31 // pred_check
          %p307 = pneg %p54
        $region34: #{tpu_custom_call.1} parent=31 // pred_check_branch
          %309 = sbr.rel (%p307) target = $region36
        $region35: #{tpu_custom_call.1} parent=31 // pred_region
          %p310 = scmp.lt.s32.totalorder %s29, 1
          %s311 = scalar_select %p310, %s29, 1
          %s312 = smul.addr %s311, 4
          %s313 = scalar_lea.vmem %s0, %s312
        $region36: #{tpu_custom_call.1} parent=31 // pred_fallthru
          _
        // Predicated region
        $region37: #{tpu_custom_call.1} parent=31 // pred_check
          %p314 = pneg %p80
        $region38: #{tpu_custom_call.1} parent=31 // pred_check_branch
          %316 = sbr.rel (%p314) target = $region40
        $region39: #{tpu_custom_call.1} parent=31 // pred_region
          %p317 = scmp.lt.s32.totalorder %s30, 3
          %s318 = scalar_select %p317, %s30, 3
          %s319 = smul.addr %s318, 4
          %s320 = smul.addr %s319, 4
          %s321 = scalar_lea.vmem %s1, %s320
        $region40: #{tpu_custom_call.1} parent=31 // pred_fallthru
          _
        // Predicated region
        $region41: #{tpu_custom_call.1} parent=31 // pred_check
          %p322 = pneg %p106
        $region42: #{tpu_custom_call.1} parent=31 // pred_check_branch
          %324 = sbr.rel (%p322) target = $region44
        $region43: #{tpu_custom_call.1} parent=31 // pred_region
          %p325 = scmp.lt.s32.totalorder %s30, 3
          %s326 = scalar_select %p325, %s30, 3
          %s327 = scalar_lea.vmem %s2, %s326
        $region44: #{tpu_custom_call.1} parent=31 // pred_fallthru
          _
        // Predicated region
        $region45: #{tpu_custom_call.1} parent=31 // pred_check
          %p328 = pneg %p132
        $region46: #{tpu_custom_call.1} parent=31 // pred_check_branch
          %330 = sbr.rel (%p328) target = $region48
        $region47: #{tpu_custom_call.1} parent=31 // pred_region
          %p331 = scmp.lt.s32.totalorder %s30, 3
          %s332 = scalar_select %p331, %s30, 3
          %s333 = smul.addr %s332, 4
          %s334 = scalar_lea.vmem %s3, %s333
        $region48: #{tpu_custom_call.1} parent=31 // pred_fallthru
          _
      $region32: #{tpu_custom_call.1} parent=5 // pred_fallthru
        _
      %p335 = scmp.le.s32.totalorder 1, %s22
      %p336 = scmp.lt.s32.totalorder %s22, 9
      %p337 = pnand %p335, %p336
      %p338 = pneg %p337
      // Predicated region
      $region49: #{tpu_custom_call.1} parent=5 // pred_check
        _
      $region50: #{tpu_custom_call.1} parent=5 // pred_check_branch
        %340 = sbr.rel (%p337) target = $region52
      $region51: #{tpu_custom_call.1} parent=5 // pred_region
        %s341 = ssub.s32 %s22, 1
        %p342 = scmp.lt.s32.totalorder %s31, 1
        %s343 = scalar_select %p342, %s31, 1
        %s344 = smul.addr %s343, 4
        %s345 = scalar_lea.vmem %s0, %s344
        %p346 = pneg %p60
        %p347 = pneg %p57
        %p348 = scmp.lt.s32.totalorder %s32, 3
        %s349 = scalar_select %p348, %s32, 3
        %s350 = smul.addr %s349, 4
        %s351 = smul.addr %s350, 4
        %s352 = scalar_lea.vmem %s1, %s351
        %p353 = pneg %p86
        %p354 = pneg %p83
        %p355 = scmp.lt.s32.totalorder %s32, 3
        %s356 = scalar_select %p355, %s32, 3
        %s357 = scalar_lea.vmem %s2, %s356
        %p358 = pneg %p112
        %p359 = pneg %p109
        %p360 = scmp.lt.s32.totalorder %s32, 3
        %s361 = scalar_select %p360, %s32, 3
        %s362 = smul.addr %s361, 4
        %s363 = scalar_lea.vmem %s3, %s362
        %p364 = pneg %p138
        %p365 = pneg %p135
        %p366 = pneg %p159
        %p367 = pneg %p156
        %p368 = pneg %p180
        %p369 = pneg %p177
        %p370 = pneg %p201
        %p371 = pneg %p198
        %p372 = pneg %p222
        %p373 = pneg %p219
        %p374 = pneg %p248
        %p375 = pneg %p245
        %s376 = sand.u32 %s235, 1
        %s377 = scalar_lea.sflag [#allocation3], %s376
        %s378 = sand.u32 %s235, 1
        %s379 = smul.addr %s378, 8
        %s380 = scalar_lea.vmem [#allocation2], %s379
        %p381 = pneg %p276
        %p382 = pneg %p273
        %s383 = sand.u32 %s263, 1
        %s384 = scalar_lea.sflag [#allocation5], %s383
        %s385 = sand.u32 %s263, 1
        %s386 = smul.addr %s385, 8
        %s387 = scalar_lea.vmem [#allocation4], %s386
        %p388 = scmp.lt.s32.totalorder %s31, 1
        %s389 = scalar_select %p388, %s31, 1
        %s390 = smul.addr %s389, 4
        %s391 = scalar_lea.vmem %s0, %s390
        %p392 = scmp.lt.s32.totalorder %s32, 3
        %s393 = scalar_select %p392, %s32, 3
        %s394 = smul.addr %s393, 4
        %s395 = smul.addr %s394, 4
        %s396 = scalar_lea.vmem %s1, %s395
        %p397 = scmp.lt.s32.totalorder %s32, 3
        %s398 = scalar_select %p397, %s32, 3
        %s399 = scalar_lea.vmem %s2, %s398
        %p400 = scmp.lt.s32.totalorder %s32, 3
        %s401 = scalar_select %p400, %s32, 3
        %s402 = smul.addr %s401, 4
        %s403 = scalar_lea.vmem %s3, %s402
        %v405 = vld [vmem:[%s391] sm:$0xf]
        %v406 = vld [vmem:[%s396] sm:$0xf]
        %v407 = vld [vmem:[%s396 + $0x4] sm:$0xf]
        %v408 = vld [vmem:[%s396 + $0x8] sm:$0xf]
        %v409 = vld [vmem:[%s396 + $0xc] sm:$0xf]
        %v410 = vld [vmem:[%s399] sm:$0x1]
        %v412 = vperm.slane %v410, 0
        %v418 = vunpack.c.l.b16 %v406
        %v419 = vunpack.c.l.b16 %v407
        %v420 = vunpack.c.l.b16 %v408
        %v421 = vunpack.c.l.b16 %v409
        %v422 = vpack.c.b16 %v419, %v418
        %v423 = vpack.c.b16 %v421, %v420
        %vm426 = vcmask 261120
        %v428 = vsel %vm426, %v405, 0
        %430 = vmatpush.bf16.msra.mxu0 0
        %431 = vmatpush.bf16.msra.mxu0 0
        %432 = vmatpush.bf16.msra.mxu0 0
        %433 = vmatpush.bf16.msra.mxu0 0
        %434 = vmatpush.bf16.msra.mxu0 0
        %435 = vmatpush.bf16.msra.mxu0 0
        %436 = vmatpush.bf16.msra.mxu0 %v423
        %437 = vmatpush.bf16.msra.mxu0 %v422
        %438 = vmatmul.bf16.gmra.mxu0 %v428
        %v439 = vpop.f32.mrf.mxu0
        %v440 = vadd.f32 %v412, %v439
        %v441 = vpop.f32.mrf.mxu0
        %442 = vdwg.mxu0
        %v443 = vld [vmem:[%s5] sm:$0xff]
        %v444 = vld [vmem:[%s6] sm:$0xff]
        %v445 = vld [vmem:[%s7] sm:$0xff]
        %v446 = vmul.f32 %v440, %v443
        %vm447 = vcmask 64512
        %v449 = vsel %vm447, %v440, 0
        %451 = vmatpush.msra.mxu0 0.0
        %452 = vmatpush.msra.mxu0 0.0
        %453 = vmatpush.msra.mxu0 0.0
        %454 = vmatpush.msra.mxu0 0.0
        %455 = vmatpush.msra.mxu0 0.0
        %456 = vmatpush.msra.mxu0 0.0
        %457 = vmatpush.msra.mxu0 0.0
        %458 = vmatpush.msra.mxu0 0.0
        %459 = vmatpush.msra.mxu0 0.0
        %460 = vmatpush.msra.mxu0 0.0
        %461 = vmatpush.msra.mxu0 0.0
        %462 = vmatpush.msra.mxu0 0.0
        %463 = vmatpush.msra.mxu0 0.0
        %464 = vmatpush.msra.mxu0 0.0
        %465 = vmatpush.msra.mxu0 0.0
        %466 = vmatpush.msra.mxu0 %v445
        %467 = vmatmul.f32.gmra.mxu0 %v449
        %v468 = vpop.f32.mrf.mxu0
        %v469 = vadd.f32 0.0, %v468
        %470 = vdwg.mxu0
        %v471 = vmul.f32 %v469, %v444
        %v472 = vadd.f32 %v446, %v471
        %474 = vrot.lane.b32.xlu0 %v443, 8
        %v475 = vpop.permute.xlu0 %474
        %v477 = vmul.f32 %v440, %v475
        %478 = vrot.lane.b32.xlu0 %v440, 120
        %v479 = vpop.permute.xlu0 %478
        %v480 = vsel %vm447, %v479, 0
        %482 = vmatpush.msra.mxu0 0.0
        %483 = vmatpush.msra.mxu0 0.0
        %484 = vmatpush.msra.mxu0 0.0
        %485 = vmatpush.msra.mxu0 0.0
        %486 = vmatpush.msra.mxu0 0.0
        %487 = vmatpush.msra.mxu0 0.0
        %488 = vmatpush.msra.mxu0 0.0
        %489 = vmatpush.msra.mxu0 0.0
        %490 = vmatpush.msra.mxu0 0.0
        %491 = vmatpush.msra.mxu0 0.0
        %492 = vmatpush.msra.mxu0 0.0
        %493 = vmatpush.msra.mxu0 0.0
        %494 = vmatpush.msra.mxu0 0.0
        %495 = vmatpush.msra.mxu0 0.0
        %496 = vmatpush.msra.mxu0 0.0
        %497 = vmatpush.msra.mxu0 %v445
        %498 = vmatmul.f32.gmra.mxu0 %v480
        %v499 = vpop.f32.mrf.mxu0
        %v500 = vadd.f32 0.0, %v499
        %501 = vdwg.mxu0
        %v502 = vmul.f32 %v500, %v444
        %504 = vrot.lane.b32.xlu0 %v502, 8
        %v505 = vpop.permute.xlu0 %504
        %v507 = vadd.f32 %v477, %v505
        %v508 = vpack.c.bf16 %v472, %v472
        %v509 = vpack.c.bf16 %v507, %v507
        %511 = vrot.lane.b32.xlu0 %v509, 120
        %v512 = vpop.permute.xlu0 %511
        %v514 = vsel %vm447, %v508, 0
        %v517 = vsel %vm447, %v512, 0
        %519 = vmatpush.bf16.xpose.msra.mxu0 0
        %520 = vmatpush.bf16.xpose.msra.mxu0 0
        %521 = vmatpush.bf16.xpose.msra.mxu0 0
        %522 = vmatpush.bf16.xpose.msra.mxu0 0
        %523 = vmatpush.bf16.xpose.msra.mxu0 0
        %524 = vmatpush.bf16.xpose.msra.mxu0 0
        %525 = vmatpush.bf16.xpose.msra.mxu0 0
        %526 = vmatpush.bf16.xpose.msra.mxu0 %v517
        %527 = vmatmul.bf16.gmra.mxu0 %v514
        %v528 = vpop.f32.mrf.mxu0
        %v529 = vadd.f32 0.0, %v528
        %v530 = vpop.f32.mrf.mxu0
        %531 = vdwg.mxu0
        %v532 = vmul.f32 %v529, 0.35355338
        %v533 = vlaneseq
        %v534 = vshrl.u32 %v533, 7
        %v535 = vlaneseq
        %v536 = vand.u32 %v535, 127
        %vm537 = vcmp.le.s32.totalorder %v536, %v534
        %v538 = vsel %vm537, %v532, -1e+30
        %v539 = vsel %vm447, %v538, -inf
        %540 = vmax.xlane.f32.xlu0 %v539
        %v541 = vpop.xlane.xlu0 %540
        %v542 = vsub.f32 %v538, %v541
        %v543 = vmul.f32 %v542, 1.442695
        %v544 = vpow.pop %v543
        %v545 = vsel %vm447, %v544, 0.0
        %546 = vadd.xlane.f32.xlu0 %v545
        %v547 = vpop.xlane.xlu0 %546
        %v548 = vrcp.pop %v547
        %v549 = vmul.f32 %v544, %v548
        %550 = vst.msk [vmem:[%s387] sm:$0xff] %vm447, %v549
        %v551 = vpack.c.bf16 %v549, %v549
        %v552 = vpack.c.bf16 %v440, %v440
        %554 = vrot.lane.b32.xlu0 %v552, 112
        %v555 = vpop.permute.xlu0 %554
        %v557 = vsel %vm447, %v551, 0
        %vm559 = vcmask 1043456
        %v561 = vsel %vm559, %v555, 0
        %563 = vmatpush.bf16.msra.mxu0 0
        %564 = vmatpush.bf16.msra.mxu0 0
        %565 = vmatpush.bf16.msra.mxu0 0
        %566 = vmatpush.bf16.msra.mxu0 0
        %567 = vmatpush.bf16.msra.mxu0 0
        %568 = vmatpush.bf16.msra.mxu0 0
        %569 = vmatpush.bf16.msra.mxu0 0
        %570 = vmatpush.bf16.msra.mxu0 %v561
        %571 = vmatmul.bf16.gmra.mxu0 %v557
        %v572 = vpop.f32.mrf.mxu0
        %v573 = vadd.f32 0.0, %v572
        %v574 = vpop.f32.mrf.mxu0
        %575 = vdwg.mxu0
        %v576 = vpack.c.bf16 %v573, %v573
        %v577 = vld [vmem:[%s403] sm:$0xf]
        %v579 = vsel %vm447, %v576, 0
        %v582 = vsel %vm559, %v577, 0
        %584 = vmatpush.bf16.msra.mxu0 0
        %585 = vmatpush.bf16.msra.mxu0 0
        %586 = vmatpush.bf16.msra.mxu0 0
        %587 = vmatpush.bf16.msra.mxu0 0
        %588 = vmatpush.bf16.msra.mxu0 0
        %589 = vmatpush.bf16.msra.mxu0 0
        %590 = vmatpush.bf16.msra.mxu0 0
        %591 = vmatpush.bf16.msra.mxu0 %v582
        %592 = vmatmul.bf16.gmra.mxu0 %v579
        %v593 = vpop.f32.mrf.mxu0
        %v594 = vadd.f32 0.0, %v593
        %v595 = vpop.f32.mrf.mxu0
        %596 = vdwg.mxu0
        %p597 = scmp.eq.s32.totalorder %s32, 0
        // Predicated region
        $region53: #{tpu_custom_call.1} parent=51 // pred_check
          %p598 = pneg %p597
        $region54: #{tpu_custom_call.1} parent=51 // pred_check_branch
          %600 = sbr.rel (%p598) target = $region56
        $region55: #{tpu_custom_call.1} parent=51 // pred_region
          %v601 = vld [vmem:[%s4] sm:$0x1]
          %v603 = vperm.slane %v601, 0
          %v605 = vadd.f32 %v603, %v594
          %606 = vst.msk [vmem:[%s380] sm:$0xff] %vm426, %v605
        $region56: #{tpu_custom_call.1} parent=51 // pred_fallthru
          _
        %p607 = scmp.gt.s32.totalorder %s32, 0
        // Predicated region
        $region57: #{tpu_custom_call.1} parent=51 // pred_check
          %p608 = pneg %p607
        $region58: #{tpu_custom_call.1} parent=51 // pred_check_branch
          %610 = sbr.rel (%p608) target = $region60
        $region59: #{tpu_custom_call.1} parent=51 // pred_region
          %v611 = vld [vmem:[%s380] sm:$0xff]
          %v612 = vadd.f32 %v611, %v594
          %613 = vst.msk [vmem:[%s380] sm:$0xff] %vm426, %v612
        $region60: #{tpu_custom_call.1} parent=51 // pred_fallthru
          _
        %s614 = sand.u32 %s235, 1
        %s615 = scalar_lea.sflag [#allocation3], %s614
        %s616 = sand.u32 %s235, 1
        %s617 = smul.addr %s616, 8
        %s618 = scalar_lea.vmem [#allocation2], %s617
        %s619 = sand.u32 %s263, 1
        %s620 = scalar_lea.sflag [#allocation5], %s619
        %s621 = sand.u32 %s263, 1
        %s622 = smul.addr %s621, 8
        %s623 = scalar_lea.vmem [#allocation4], %s622
        // Predicated region
        $region61: #{tpu_custom_call.1} parent=51 // pred_check
          %p624 = pneg %p245
        $region62: #{tpu_custom_call.1} parent=51 // pred_check_branch
          %626 = sbr.rel (%p624) target = $region64
        $region63: #{tpu_custom_call.1} parent=51 // pred_region
          %628 = vsyncadd %s615, 0
          %s629 = smul.addr %s31, 8
          %s630 = scalar_lea.hbm %s8, %s629
          %s632 = sshll.u32 %s618, 4
          %s633 = int_to_ptr.vmem [resolvable:$true] %s632
          %s634 = sshll.u32 %s630, 4
          %s635 = int_to_ptr.hbm [resolvable:$true] %s634
          %637 = dma.vmem_to_hbm [thread:$0]  %s633, 128, %s635, %s615
        $region64: #{tpu_custom_call.1} parent=51 // pred_fallthru
          _
        // Predicated region
        $region65: #{tpu_custom_call.1} parent=51 // pred_check
          %p638 = pneg %p273
        $region66: #{tpu_custom_call.1} parent=51 // pred_check_branch
          %640 = sbr.rel (%p638) target = $region68
        $region67: #{tpu_custom_call.1} parent=51 // pred_region
          %642 = vsyncadd %s620, 0
          %s643 = smul.addr %s31, 4
          %s644 = sadd.s32 %s32, %s643
          %s645 = smul.addr %s644, 8
          %s646 = scalar_lea.hbm %s9, %s645
          %s648 = sshll.u32 %s623, 4
          %s649 = int_to_ptr.vmem [resolvable:$true] %s648
          %s650 = sshll.u32 %s646, 4
          %s651 = int_to_ptr.hbm [resolvable:$true] %s650
          %653 = dma.vmem_to_hbm [thread:$0]  %s649, 128, %s651, %s620
        $region68: #{tpu_custom_call.1} parent=51 // pred_fallthru
          _
      $region52: #{tpu_custom_call.1} parent=5 // pred_fallthru
        _
      %p654 = scmp.le.s32.totalorder 2, %s22
      // Predicated region
      $region69: #{tpu_custom_call.1} parent=5 // pred_check
        %p655 = pneg %p654
      $region70: #{tpu_custom_call.1} parent=5 // pred_check_branch
        %657 = sbr.rel (%p655) target = $region72
      $region71: #{tpu_custom_call.1} parent=5 // pred_region
        %s658 = ssub.s32 %s22, 2
        // Predicated region
        $region73: #{tpu_custom_call.1} parent=71 // pred_check
          %p659 = pneg %p251
        $region74: #{tpu_custom_call.1} parent=71 // pred_check_branch
          %661 = sbr.rel (%p659) target = $region76
        $region75: #{tpu_custom_call.1} parent=71 // pred_region
          %s662 = sand.u32 %s236, 1
          %s663 = scalar_lea.sflag [#allocation3], %s662
          %s664 = sand.u32 %s236, 1
          %s665 = smul.addr %s664, 8
          %s666 = scalar_lea.vmem [#allocation2], %s665
          %668 = dma.done %s663, 128
        $region76: #{tpu_custom_call.1} parent=71 // pred_fallthru
          _
        // Predicated region
        $region77: #{tpu_custom_call.1} parent=71 // pred_check
          %p669 = pneg %p279
        $region78: #{tpu_custom_call.1} parent=71 // pred_check_branch
          %671 = sbr.rel (%p669) target = $region80
        $region79: #{tpu_custom_call.1} parent=71 // pred_region
          %s672 = sand.u32 %s264, 1
          %s673 = scalar_lea.sflag [#allocation5], %s672
          %s674 = sand.u32 %s264, 1
          %s675 = smul.addr %s674, 8
          %s676 = scalar_lea.vmem [#allocation4], %s675
          %678 = dma.done %s673, 128
        $region80: #{tpu_custom_call.1} parent=71 // pred_fallthru
          _
      $region72: #{tpu_custom_call.1} parent=5 // pred_fallthru
        _
    $region6: #{tpu_custom_call.1} parent=1 // loop_footer
      %s26 = sadd.s32 1, %s22
    $region7: #{tpu_custom_call.1} parent=1 // loop_footer_branch
      %21 = sbr.rel target = $region3
    $region8: #{tpu_custom_call.1} parent=1 // loop_exit
      _
    %679 = vsyncpa [#allocation3], 1
    %s680 = scalar_lea.sflag [#allocation3], 1
    %681 = vsyncpa %s680, 1
    %682 = vsyncpa [#allocation5], 1
    %s683 = scalar_lea.sflag [#allocation5], 1
    %684 = vsyncpa %s683, 1

</llo_original>
